<compile_context>
chip_gen: v7x
topology: tpu7x:2x2x1
jax: 0.10.0
libtpu: 0.0.40
codegen_flags: <defaults>
</compile_context>

<pallas_src>
import functools

import jax
import jax.numpy as jnp
from jax.experimental import pallas as pl
from jax.experimental.pallas import tpu as pltpu


def _round_up(x: int, m: int) -> int:
    return (x + m - 1) // m * m


def _num_tensorcores() -> int:
    """Best-effort TensorCore-per-chip query (v7x has 2; v5e/v6e have 1)."""
    try:
        info = pltpu.get_tpu_info()
        for attr in ("num_cores", "core_count", "tensorcore_count", "num_tensorcores"):
            n = getattr(info, attr, None)
            if isinstance(n, int) and n > 0:
                return n
    except Exception:
        pass
    try:
        d = jax.local_devices()[0]
        for attr in ("num_cores", "core_count"):
            n = getattr(d, attr, None)
            if isinstance(n, int) and n > 0:
                return n
    except Exception:
        pass
    return 1


def _choose_tile_b(B: int, num_cores: int, cap: int = 1024) -> int:
    # Lane rule for the (1, tile_b) output block: tile_b must equal B or be a
    # multiple of 128 (multiples of 256 also fill the v6e/v7x MXU M dim).
    if num_cores > 1 and B >= 256:
        tile = _round_up(pl.cdiv(B, num_cores), 128)
        if tile >= 256:
            tile = _round_up(tile, 256)
        return min(tile, cap)
    if B <= cap:
        return B
    return cap  # 1024: multiple of 256, ~160 KB of double-buffered input tiles


def _masked_layernorm(h, gamma, beta, true_width, eps=1e-5):
    """Two-pass LayerNorm over the first `true_width` lanes (pad lanes are 0)."""
    fpad = h.shape[-1]
    if fpad == true_width:
        mu = jnp.mean(h, axis=-1, keepdims=True)
        d = h - mu
        var = jnp.mean(d * d, axis=-1, keepdims=True)
    else:
        inv_n = 1.0 / float(true_width)
        mu = jnp.sum(h, axis=-1, keepdims=True) * inv_n          # pads are exactly 0
        lane = jax.lax.broadcasted_iota(jnp.int32, h.shape, dimension=h.ndim - 1)
        d = jnp.where(lane < true_width, h - mu, 0.0)
        var = jnp.sum(d * d, axis=-1, keepdims=True) * inv_n
    # Padded gamma/beta are 0 => padded LN output is exactly 0.
    return (h - mu) * jax.lax.rsqrt(var + eps) * gamma + beta


def _critic_kernel(*refs, use_ln: bool, s_dim: int, a_dim: int,
                   f1_true: int, f2_true: int):
    if use_ln:
        (s_ref, a_ref, w1_ref, b1_ref, w2_ref, b2_ref, w3_ref, b3_ref,
         g1_ref, be1_ref, g2_ref, be2_ref, out_ref, x_ref) = refs
    else:
        (s_ref, a_ref, w1_ref, b1_ref, w2_ref, b2_ref, w3_ref, b3_ref,
         out_ref, x_ref) = refs

    # Fused concat: two cheap masked VPU copies into a (tile_b, S+A) VMEM
    # scratch so fc1 is a single MXU matmul instead of two latency-bound
    # small-K dots.
    x_ref[:, 0:s_dim] = s_ref[...]
    x_ref[:, s_dim:s_dim + a_dim] = a_ref[...]
    x = x_ref[...]                                   # (tile_b, S+A) bf16

    # fc1 + relu (accumulate in f32 on the MXU, elementwise in f32).
    h1 = jnp.dot(x, w1_ref[...], preferred_element_type=jnp.float32) + b1_ref[...]
    h1 = jnp.maximum(h1, 0.0)
    if use_ln:
        h1 = _masked_layernorm(h1, g1_ref[...], be1_ref[...], f1_true)

    # fc2 + relu
    h2 = (jnp.dot(h1.astype(jnp.bfloat16), w2_ref[...],
                  preferred_element_type=jnp.float32) + b2_ref[...])
    h2 = jnp.maximum(h2, 0.0)
    if use_ln:
        h2 = _masked_layernorm(h2, g2_ref[...], be2_ref[...], f2_true)

    # q1 head: [1,F2p] . [tile_b,F2p]^T -> [1,tile_b]  (lane-dense output row).
    q = jax.lax.dot_general(
        w3_ref[...], h2.astype(jnp.bfloat16),
        dimension_numbers=(((1,), (1,)), ((), ())),
        preferred_element_type=jnp.float32,
    )
    out_ref[...] = (q + b3_ref[0]).astype(out_ref.dtype)


def critic_forward(state, action, packed, *, use_ln: bool,
                   tile_b: int | None = None, num_cores: int | None = None,
                   keep_lane_dense: bool = False):
    """state: [B, S] f32, action: [B, A] f32 -> q: [B, 1] f32 (or (1,B) if
    keep_lane_dense=True, which skips the trailing relayout)."""
    B, S = state.shape
    _, A = action.shape
    F1p = packed["w1"].shape[1]
    F2p = packed["w2"].shape[1]
    f1_true, f2_true = packed["true_dims"]

    if num_cores is None:
        num_cores = _num_tensorcores()
    if tile_b is None:
        tile_b = _choose_tile_b(B, num_cores)
    grid = (pl.cdiv(B, tile_b),)

    # bf16 matmul operands: halves HBM->VMEM bytes of the streamed tiles and
    # uses the MXU's native bf16 path; elementwise math stays f32 in-kernel.
    state_b = state.astype(jnp.bfloat16)
    action_b = action.astype(jnp.bfloat16)

    args = [state_b, action_b, packed["w1"], packed["b1"], packed["w2"],
            packed["b2"], packed["w3"], packed["b3"]]
    if use_ln:
        args += [packed["g1"], packed["be1"], packed["g2"], packed["be2"]]

    kern = functools.partial(_critic_kernel, use_ln=use_ln, s_dim=S, a_dim=A,
                             f1_true=f1_true, f2_true=f2_true)

    flops = 2 * B * ((S + A) * F1p + F1p * F2p + F2p)
    bytes_accessed = (2 * B * (S + A) + 4 * B
                      + 2 * ((S + A) * F1p + F1p * F2p + F2p)
                      + 4 * (F1p + F2p + 1)
                      + (8 * (F1p + F2p) if use_ln else 0))
    cost = pl.CostEstimate(flops=flops,
                           transcendentals=(2 * B if use_ln else 0),
                           bytes_accessed=bytes_accessed)

    # Explicit VMEM limit sized from the actual footprint (resident weights are
    # single-buffered, activations double-buffered), capped at v7x's 64 MiB.
    resident_bytes = (2 * ((S + A) * F1p + F1p * F2p + F2p)
                      + 4 * (F1p + F2p)
                      + (8 * (F1p + F2p) if use_ln else 0))
    stream_bytes = 2 * (2 * tile_b * (S + A) * 2) + 2 * (4 * tile_b)
    work_bytes = 8 * tile_b * (F1p + F2p) + 2 * tile_b * (S + A)
    vmem_limit = int(min(64 * 1024 * 1024,
                         max(32 * 1024 * 1024,
                             2 * (resident_bytes + stream_bytes + work_bytes))))

    out_shape = jax.ShapeDtypeStruct((1, B), jnp.float32)       # lane-dense
    out_spec = pl.BlockSpec((1, tile_b), lambda i: (0, i))
    batch_specs = [pl.BlockSpec((tile_b, S), lambda i: (i, 0)),
                   pl.BlockSpec((tile_b, A), lambda i: (i, 0))]

    def build(single_buffer_weights: bool):
        def resident(shape):
            n = len(shape)
            idx = lambda i: (0,) * n
            if single_buffer_weights:
                # Constant index_map => block is only DMA'd once; the second
                # pipeline buffer would be dead VMEM.
                return pl.BlockSpec(shape, idx, pipeline_mode=pl.Buffered(1))
            return pl.BlockSpec(shape, idx)

        in_specs = batch_specs + [
            resident((S + A, F1p)),                              # w1
            resident((1, F1p)),                                  # b1
            resident((F1p, F2p)),                                # w2
            resident((1, F2p)),                                  # b2
            resident((1, F2p)),                                  # w3 (row)
            pl.BlockSpec((1,), lambda i: (0,),                   # b3 scalar
                         memory_space=pltpu.MemorySpace.SMEM),
        ]
        if use_ln:
            in_specs += [resident((1, F1p)), resident((1, F1p)),
                         resident((1, F2p)), resident((1, F2p))]

        return pl.pallas_call(
            kern,
            out_shape=out_shape,
            grid=grid,
            in_specs=in_specs,
            out_specs=out_spec,
            scratch_shapes=[pltpu.VMEM((tile_b, S + A), jnp.bfloat16)],
            compiler_params=pltpu.CompilerParams(
                dimension_semantics=("parallel",),
                vmem_limit_bytes=vmem_limit),
            cost_estimate=cost,
        )

    try:
        q_row = build(True)(*args)
    except Exception:
        # Fallback if this jax version rejects Buffered(1) on pallas_call specs.
        q_row = build(False)(*args)

    if keep_lane_dense:
        return q_row                       # (1, B), no relayout
    return q_row.reshape(B, 1)


def init_params(key, input_dim, n_actions, fc1_dims, fc2_dims):
    """Torch-nn.Linear-style init: U(-1/sqrt(fan_in), +1/sqrt(fan_in))."""
    def linear(k, fan_in, fan_out):
        kw, kb = jax.random.split(k)
        bound = 1.0 / jnp.sqrt(jnp.float32(fan_in))
        w = jax.random.uniform(kw, (fan_in, fan_out), jnp.float32, -bound, bound)
        b = jax.random.uniform(kb, (fan_out,), jnp.float32, -bound, bound)
        return w, b

    k1, k2, k3 = jax.random.split(key, 3)
    w1, b1 = linear(k1, input_dim + n_actions, fc1_dims)
    w2, b2 = linear(k2, fc1_dims, fc2_dims)
    w3, b3 = linear(k3, fc2_dims, 1)
    return {
        "w1": w1, "b1": b1,                # [S+A, F1], [F1]
        "w2": w2, "b2": b2,                # [F1, F2],  [F2]
        "w3": w3, "b3": b3,                # [F2, 1],   [1]
        # LayerNorm params (identity init, as in torch nn.LayerNorm)
        "g1": jnp.ones((fc1_dims,), jnp.float32),
        "be1": jnp.zeros((fc1_dims,), jnp.float32),
        "g2": jnp.ones((fc2_dims,), jnp.float32),
        "be2": jnp.zeros((fc2_dims,), jnp.float32),
    }


def pack_params(params):
    """Pad hidden dims to multiples of 128 and cast matmul operands to bf16.

    Zero padding is exact: padded weight columns/rows and biases are zero
    (ReLU(0)=0), LN stats are masked to the true width in-kernel, and padded
    gamma/beta are zero so padded LN outputs are exactly 0.
    Done once, outside the per-step forward.
    """
    sa, F1 = params["w1"].shape
    F2 = params["w2"].shape[1]
    F1p, F2p = _round_up(F1, 128), _round_up(F2, 128)
    p1, p2 = F1p - F1, F2p - F2

    def row(v, pad, width):
        return jnp.pad(v, (0, pad)).reshape(1, width).astype(jnp.float32)

    return {
        "w1": jnp.pad(params["w1"], ((0, 0), (0, p1))).astype(jnp.bfloat16),
        "b1": row(params["b1"], p1, F1p),
        "w2": jnp.pad(params["w2"], ((0, p1), (0, p2))).astype(jnp.bfloat16),
        "b2": row(params["b2"], p2, F2p),
        "w3": jnp.pad(params["w3"].T, ((0, 0), (0, p2))).astype(jnp.bfloat16),
        "b3": params["b3"].reshape(1).astype(jnp.float32),
        "g1": row(params["g1"], p1, F1p), "be1": row(params["be1"], p1, F1p),
        "g2": row(params["g2"], p2, F2p), "be2": row(params["be2"], p2, F2p),
        "true_dims": (F1, F2),
    }


def _reference(state, action, params, *, use_ln):
    """Pure-JAX reference with the same bf16 rounding of matmul operands."""
    bf = lambda t: t.astype(jnp.bfloat16).astype(jnp.float32)

    def ln(h, g, be):
        mu = h.mean(-1, keepdims=True)
        var = ((h - mu) ** 2).mean(-1, keepdims=True)
        return (h - mu) * jax.lax.rsqrt(var + 1e-5) * g + be

    x = bf(jnp.concatenate([state, action], axis=1))
    h1 = jnp.maximum(x @ bf(params["w1"]) + params["b1"], 0.0)
    if use_ln:
        h1 = ln(h1, params["g1"], params["be1"])
    h2 = jnp.maximum(bf(h1) @ bf(params["w2"]) + params["b2"], 0.0)
    if use_ln:
        h2 = ln(h2, params["g2"], params["be2"])
    return bf(h2) @ bf(params["w3"]) + params["b3"]


if __name__ == "__main__":
    # Small shapes consistent with the module: input_dims=(16,), n_actions=4,
    # fc1_dims=64, fc2_dims=32, batch=8.
    B, S, A, F1, F2 = 8, 16, 4, 64, 32

    key = jax.random.PRNGKey(0)
    kp, ks, ka = jax.random.split(key, 3)
    params = init_params(kp, S, A, F1, F2)
    packed = pack_params(params)           # pad to 128-multiples + bf16, once
    state = jax.random.normal(ks, (B, S), jnp.float32)
    action = jax.random.normal(ka, (B, A), jnp.float32)

    ok = True
    for use_ln in (False, True):  # default module has ln=False; also test ln=True
        q = critic_forward(state, action, packed, use_ln=use_ln)
        q = jax.block_until_ready(q)
        q_ref = _reference(state, action, params, use_ln=use_ln)
        assert q.shape == (B, 1), q.shape
        if not jnp.allclose(q, q_ref, atol=1e-3, rtol=1e-3):
            ok = False
            print("MISMATCH use_ln=", use_ln,
                  float(jnp.max(jnp.abs(q - q_ref))))

    # TODO(synk): Adam optimizer, device placement (.to) and checkpointing are
    # training-side state with no Pallas forward-pass equivalent.  Evaluating
    # both TD3 critics in one pallas_call (stacked weights over a leading grid
    # axis) is a wrapper-level extension of this same kernel body.
    if ok:
        print("KERNEL_OK")
</pallas_src>

<mosaic_0001>
module attributes {stable_mosaic.version = 11 : i64} {
  func.func @_critic_kernel(%arg0: i32, %arg1: memref<8x16xbf16, #tpu.memory_space<vmem>>, %arg2: memref<8x4xbf16, #tpu.memory_space<vmem>>, %arg3: memref<20x128xbf16, #tpu.memory_space<vmem>>, %arg4: memref<1x128xf32, #tpu.memory_space<vmem>>, %arg5: memref<128x128xbf16, #tpu.memory_space<vmem>>, %arg6: memref<1x128xf32, #tpu.memory_space<vmem>>, %arg7: memref<1x128xbf16, #tpu.memory_space<vmem>>, %arg8: memref<1xf32, #tpu.memory_space<smem>>, %arg9: memref<1x8xf32, #tpu.memory_space<vmem>>, %arg10: memref<8x20xbf16, #tpu.memory_space<vmem>>) attributes {dimension_semantics = [#tpu.dimension_semantics<parallel>], iteration_bounds = array<i64: 1>, scalar_prefetch = 0 : i64, scratch_operands = 1 : i64, tpu.core_type = #tpu.core_type<tc>, window_params = [{transform_indices = @transform_0, window_bounds = array<i64: 8, 16>}, {transform_indices = @transform_1, window_bounds = array<i64: 8, 4>}, {pipeline_mode = #tpu.pipeline_mode<synchronous>, transform_indices = @transform_2, window_bounds = array<i64: 20, 128>}, {pipeline_mode = #tpu.pipeline_mode<synchronous>, transform_indices = @transform_3, window_bounds = array<i64: 1, 128>}, {pipeline_mode = #tpu.pipeline_mode<synchronous>, transform_indices = @transform_4, window_bounds = array<i64: 128, 128>}, {pipeline_mode = #tpu.pipeline_mode<synchronous>, transform_indices = @transform_5, window_bounds = array<i64: 1, 128>}, {pipeline_mode = #tpu.pipeline_mode<synchronous>, transform_indices = @transform_6, window_bounds = array<i64: 1, 128>}, {transform_indices = @transform_7, window_bounds = array<i64: 1>}, {transform_indices = @transform_8, window_bounds = array<i64: 1, 8>}]} {
    %c0 = arith.constant 0 : index
    %c0_0 = arith.constant 0 : index
    %0 = vector.load %arg1[%c0, %c0_0] : memref<8x16xbf16, #tpu.memory_space<vmem>>, vector<8x16xbf16>
    %c0_1 = arith.constant 0 : index
    %c0_2 = arith.constant 0 : index
    %1 = vector.load %arg10[%c0_1, %c0_2] : memref<8x20xbf16, #tpu.memory_space<vmem>>, vector<8x16xbf16>
    tpu.vector_store %arg10[%c0_1, %c0_2], %0 {strides = array<i32>} : memref<8x20xbf16, #tpu.memory_space<vmem>>, vector<8x16xbf16>,
    %c0_3 = arith.constant 0 : index
    %c0_4 = arith.constant 0 : index
    %2 = vector.load %arg2[%c0_3, %c0_4] : memref<8x4xbf16, #tpu.memory_space<vmem>>, vector<8x4xbf16>
    %c0_5 = arith.constant 0 : index
    %c16 = arith.constant 16 : index
    %3 = vector.load %arg10[%c0_5, %c16] : memref<8x20xbf16, #tpu.memory_space<vmem>>, vector<8x4xbf16>
    tpu.vector_store %arg10[%c0_5, %c16], %2 {strides = array<i32>} : memref<8x20xbf16, #tpu.memory_space<vmem>>, vector<8x4xbf16>,
    %c0_6 = arith.constant 0 : index
    %c0_7 = arith.constant 0 : index
    %4 = vector.load %arg10[%c0_6, %c0_7] : memref<8x20xbf16, #tpu.memory_space<vmem>>, vector<8x20xbf16>
    %c0_8 = arith.constant 0 : index
    %c0_9 = arith.constant 0 : index
    %5 = vector.load %arg3[%c0_8, %c0_9] : memref<20x128xbf16, #tpu.memory_space<vmem>>, vector<20x128xbf16>
    %cst = arith.constant dense<0.000000e+00> : vector<8x128xf32>
    %6 = tpu.matmul %4, %5, %cst {dimension_numbers = #tpu.dot_dimension_numbers<[1], [0], [0], [1], [0, 0, 1, 1], [], []>} : vector<8x20xbf16>, vector<20x128xbf16>, vector<8x128xf32> -> vector<8x128xf32>
    %c0_10 = arith.constant 0 : index
    %c0_11 = arith.constant 0 : index
    %7 = vector.load %arg4[%c0_10, %c0_11] : memref<1x128xf32, #tpu.memory_space<vmem>>, vector<1x128xf32>
    %8 = vector.broadcast %7 : vector<1x128xf32> to vector<8x128xf32>
    %9 = arith.addf %6, %8 : vector<8x128xf32>
    %cst_12 = arith.constant 0.000000e+00 : f32
    %10 = vector.broadcast %cst_12 : f32 to vector<8x128xf32>
    %11 = arith.maximumf %9, %10 : vector<8x128xf32>
    %12 = arith.truncf %11 : vector<8x128xf32> to vector<8x128xbf16>
    %c0_13 = arith.constant 0 : index
    %c0_14 = arith.constant 0 : index
    %13 = vector.load %arg5[%c0_13, %c0_14] : memref<128x128xbf16, #tpu.memory_space<vmem>>, vector<128x128xbf16>
    %cst_15 = arith.constant dense<0.000000e+00> : vector<8x128xf32>
    %14 = tpu.matmul %12, %13, %cst_15 {dimension_numbers = #tpu.dot_dimension_numbers<[1], [0], [0], [1], [0, 0, 1, 1], [], []>} : vector<8x128xbf16>, vector<128x128xbf16>, vector<8x128xf32> -> vector<8x128xf32>
    %c0_16 = arith.constant 0 : index
    %c0_17 = arith.constant 0 : index
    %15 = vector.load %arg6[%c0_16, %c0_17] : memref<1x128xf32, #tpu.memory_space<vmem>>, vector<1x128xf32>
    %16 = vector.broadcast %15 : vector<1x128xf32> to vector<8x128xf32>
    %17 = arith.addf %14, %16 : vector<8x128xf32>
    %cst_18 = arith.constant 0.000000e+00 : f32
    %18 = vector.broadcast %cst_18 : f32 to vector<8x128xf32>
    %19 = arith.maximumf %17, %18 : vector<8x128xf32>
    %c0_19 = arith.constant 0 : index
    %c0_20 = arith.constant 0 : index
    %20 = vector.load %arg7[%c0_19, %c0_20] : memref<1x128xbf16, #tpu.memory_space<vmem>>, vector<1x128xbf16>
    %21 = arith.truncf %19 : vector<8x128xf32> to vector<8x128xbf16>
    %cst_21 = arith.constant dense<0.000000e+00> : vector<1x8xf32>
    %22 = tpu.matmul %20, %21, %cst_21 {dimension_numbers = #tpu.dot_dimension_numbers<[1], [1], [0], [0], [0, 0, 1, 0], [], []>} : vector<1x128xbf16>, vector<8x128xbf16>, vector<1x8xf32> -> vector<1x8xf32>
    %c0_22 = arith.constant 0 : index
    %23 = memref.load %arg8[%c0_22] : memref<1xf32, #tpu.memory_space<smem>>
    %24 = vector.broadcast %23 : f32 to vector<1x8xf32>
    %25 = arith.addf %22, %24 : vector<1x8xf32>
    %c0_23 = arith.constant 0 : index
    %c0_24 = arith.constant 0 : index
    %26 = vector.load %arg9[%c0_23, %c0_24] : memref<1x8xf32, #tpu.memory_space<vmem>>, vector<1x8xf32>
    tpu.vector_store %arg9[%c0_23, %c0_24], %25 {strides = array<i32>} : memref<1x8xf32, #tpu.memory_space<vmem>>, vector<1x8xf32>,
    return
  }
  func.func @transform_0(%arg0: i32) -> (i32, i32) {
    %c0_i32 = arith.constant 0 : i32
    %c0_i32_0 = arith.constant 0 : i32
    return %arg0, %c0_i32 : i32, i32
  }
  func.func @transform_1(%arg0: i32) -> (i32, i32) {
    %c0_i32 = arith.constant 0 : i32
    %c0_i32_0 = arith.constant 0 : i32
    return %arg0, %c0_i32 : i32, i32
  }
  func.func @transform_2(%arg0: i32) -> (i32, i32) {
    %c0_i32 = arith.constant 0 : i32
    %c0_i32_0 = arith.constant 0 : i32
    %c0_i32_1 = arith.constant 0 : i32
    return %c0_i32, %c0_i32_0 : i32, i32
  }
  func.func @transform_3(%arg0: i32) -> (i32, i32) {
    %c0_i32 = arith.constant 0 : i32
    %c0_i32_0 = arith.constant 0 : i32
    %c0_i32_1 = arith.constant 0 : i32
    return %c0_i32, %c0_i32_0 : i32, i32
  }
  func.func @transform_4(%arg0: i32) -> (i32, i32) {
    %c0_i32 = arith.constant 0 : i32
    %c0_i32_0 = arith.constant 0 : i32
    %c0_i32_1 = arith.constant 0 : i32
    return %c0_i32, %c0_i32_0 : i32, i32
  }
  func.func @transform_5(%arg0: i32) -> (i32, i32) {
    %c0_i32 = arith.constant 0 : i32
    %c0_i32_0 = arith.constant 0 : i32
    %c0_i32_1 = arith.constant 0 : i32
    return %c0_i32, %c0_i32_0 : i32, i32
  }
  func.func @transform_6(%arg0: i32) -> (i32, i32) {
    %c0_i32 = arith.constant 0 : i32
    %c0_i32_0 = arith.constant 0 : i32
    %c0_i32_1 = arith.constant 0 : i32
    return %c0_i32, %c0_i32_0 : i32, i32
  }
  func.func @transform_7(%arg0: i32) -> i32 {
    %c0_i32 = arith.constant 0 : i32
    %c0_i32_0 = arith.constant 0 : i32
    return %c0_i32 : i32
  }
  func.func @transform_8(%arg0: i32) -> (i32, i32) {
    %c0_i32 = arith.constant 0 : i32
    %c0_i32_0 = arith.constant 0 : i32
    return %c0_i32, %arg0 : i32, i32
  }
}

module attributes {stable_mosaic.version = 11 : i64} {
  func.func @_critic_kernel(%arg0: i32, %arg1: memref<8x16xbf16, #tpu.memory_space<vmem>>, %arg2: memref<8x4xbf16, #tpu.memory_space<vmem>>, %arg3: memref<20x128xbf16, #tpu.memory_space<vmem>>, %arg4: memref<1x128xf32, #tpu.memory_space<vmem>>, %arg5: memref<128x128xbf16, #tpu.memory_space<vmem>>, %arg6: memref<1x128xf32, #tpu.memory_space<vmem>>, %arg7: memref<1x128xbf16, #tpu.memory_space<vmem>>, %arg8: memref<1xf32, #tpu.memory_space<smem>>, %arg9: memref<1x8xf32, #tpu.memory_space<vmem>>, %arg10: memref<8x20xbf16, #tpu.memory_space<vmem>>) attributes {dimension_semantics = [#tpu.dimension_semantics<parallel>], iteration_bounds = array<i64: 1>, scalar_prefetch = 0 : i64, scratch_operands = 1 : i64, tpu.core_type = #tpu.core_type<tc>, window_params = [{transform_indices = @transform_0, window_bounds = array<i64: 8, 16>}, {transform_indices = @transform_1, window_bounds = array<i64: 8, 4>}, {pipeline_mode = #tpu.pipeline_mode<synchronous>, transform_indices = @transform_2, window_bounds = array<i64: 20, 128>}, {pipeline_mode = #tpu.pipeline_mode<synchronous>, transform_indices = @transform_3, window_bounds = array<i64: 1, 128>}, {pipeline_mode = #tpu.pipeline_mode<synchronous>, transform_indices = @transform_4, window_bounds = array<i64: 128, 128>}, {pipeline_mode = #tpu.pipeline_mode<synchronous>, transform_indices = @transform_5, window_bounds = array<i64: 1, 128>}, {pipeline_mode = #tpu.pipeline_mode<synchronous>, transform_indices = @transform_6, window_bounds = array<i64: 1, 128>}, {transform_indices = @transform_7, window_bounds = array<i64: 1>}, {transform_indices = @transform_8, window_bounds = array<i64: 1, 8>}]} {
    %c0 = arith.constant 0 : index
    %c0_0 = arith.constant 0 : index
    %0 = vector.load %arg1[%c0, %c0_0] : memref<8x16xbf16, #tpu.memory_space<vmem>>, vector<8x16xbf16>
    %c0_1 = arith.constant 0 : index
    %c0_2 = arith.constant 0 : index
    %1 = vector.load %arg10[%c0_1, %c0_2] : memref<8x20xbf16, #tpu.memory_space<vmem>>, vector<8x16xbf16>
    tpu.vector_store %arg10[%c0_1, %c0_2], %0 {strides = array<i32>} : memref<8x20xbf16, #tpu.memory_space<vmem>>, vector<8x16xbf16>,
    %c0_3 = arith.constant 0 : index
    %c0_4 = arith.constant 0 : index
    %2 = vector.load %arg2[%c0_3, %c0_4] : memref<8x4xbf16, #tpu.memory_space<vmem>>, vector<8x4xbf16>
    %c0_5 = arith.constant 0 : index
    %c16 = arith.constant 16 : index
    %3 = vector.load %arg10[%c0_5, %c16] : memref<8x20xbf16, #tpu.memory_space<vmem>>, vector<8x4xbf16>
    tpu.vector_store %arg10[%c0_5, %c16], %2 {strides = array<i32>} : memref<8x20xbf16, #tpu.memory_space<vmem>>, vector<8x4xbf16>,
    %c0_6 = arith.constant 0 : index
    %c0_7 = arith.constant 0 : index
    %4 = vector.load %arg10[%c0_6, %c0_7] : memref<8x20xbf16, #tpu.memory_space<vmem>>, vector<8x20xbf16>
    %c0_8 = arith.constant 0 : index
    %c0_9 = arith.constant 0 : index
    %5 = vector.load %arg3[%c0_8, %c0_9] : memref<20x128xbf16, #tpu.memory_space<vmem>>, vector<20x128xbf16>
    %cst = arith.constant dense<0.000000e+00> : vector<8x128xf32>
    %6 = tpu.matmul %4, %5, %cst {dimension_numbers = #tpu.dot_dimension_numbers<[1], [0], [0], [1], [0, 0, 1, 1], [], []>} : vector<8x20xbf16>, vector<20x128xbf16>, vector<8x128xf32> -> vector<8x128xf32>
    %c0_10 = arith.constant 0 : index
    %c0_11 = arith.constant 0 : index
    %7 = vector.load %arg4[%c0_10, %c0_11] : memref<1x128xf32, #tpu.memory_space<vmem>>, vector<1x128xf32>
    %8 = vector.broadcast %7 : vector<1x128xf32> to vector<8x128xf32>
    %9 = arith.addf %6, %8 : vector<8x128xf32>
    %cst_12 = arith.constant 0.000000e+00 : f32
    %10 = vector.broadcast %cst_12 : f32 to vector<8x128xf32>
    %11 = arith.maximumf %9, %10 : vector<8x128xf32>
    %12 = arith.truncf %11 : vector<8x128xf32> to vector<8x128xbf16>
    %c0_13 = arith.constant 0 : index
    %c0_14 = arith.constant 0 : index
    %13 = vector.load %arg5[%c0_13, %c0_14] : memref<128x128xbf16, #tpu.memory_space<vmem>>, vector<128x128xbf16>
    %cst_15 = arith.constant dense<0.000000e+00> : vector<8x128xf32>
    %14 = tpu.matmul %12, %13, %cst_15 {dimension_numbers = #tpu.dot_dimension_numbers<[1], [0], [0], [1], [0, 0, 1, 1], [], []>} : vector<8x128xbf16>, vector<128x128xbf16>, vector<8x128xf32> -> vector<8x128xf32>
    %c0_16 = arith.constant 0 : index
    %c0_17 = arith.constant 0 : index
    %15 = vector.load %arg6[%c0_16, %c0_17] : memref<1x128xf32, #tpu.memory_space<vmem>>, vector<1x128xf32>
    %16 = vector.broadcast %15 : vector<1x128xf32> to vector<8x128xf32>
    %17 = arith.addf %14, %16 : vector<8x128xf32>
    %cst_18 = arith.constant 0.000000e+00 : f32
    %18 = vector.broadcast %cst_18 : f32 to vector<8x128xf32>
    %19 = arith.maximumf %17, %18 : vector<8x128xf32>
    %c0_19 = arith.constant 0 : index
    %c0_20 = arith.constant 0 : index
    %20 = vector.load %arg7[%c0_19, %c0_20] : memref<1x128xbf16, #tpu.memory_space<vmem>>, vector<1x128xbf16>
    %21 = arith.truncf %19 : vector<8x128xf32> to vector<8x128xbf16>
    %cst_21 = arith.constant dense<0.000000e+00> : vector<1x8xf32>
    %22 = tpu.matmul %20, %21, %cst_21 {dimension_numbers = #tpu.dot_dimension_numbers<[1], [1], [0], [0], [0, 0, 1, 0], [], []>} : vector<1x128xbf16>, vector<8x128xbf16>, vector<1x8xf32> -> vector<1x8xf32>
    %c0_22 = arith.constant 0 : index
    %23 = memref.load %arg8[%c0_22] : memref<1xf32, #tpu.memory_space<smem>>
    %24 = vector.broadcast %23 : f32 to vector<1x8xf32>
    %25 = arith.addf %22, %24 : vector<1x8xf32>
    %c0_23 = arith.constant 0 : index
    %c0_24 = arith.constant 0 : index
    %26 = vector.load %arg9[%c0_23, %c0_24] : memref<1x8xf32, #tpu.memory_space<vmem>>, vector<1x8xf32>
    tpu.vector_store %arg9[%c0_23, %c0_24], %25 {strides = array<i32>} : memref<1x8xf32, #tpu.memory_space<vmem>>, vector<1x8xf32>,
    return
  }
  func.func @transform_0(%arg0: i32) -> (i32, i32) {
    %c0_i32 = arith.constant 0 : i32
    %c0_i32_0 = arith.constant 0 : i32
    return %arg0, %c0_i32 : i32, i32
  }
  func.func @transform_1(%arg0: i32) -> (i32, i32) {
    %c0_i32 = arith.constant 0 : i32
    %c0_i32_0 = arith.constant 0 : i32
    return %arg0, %c0_i32 : i32, i32
  }
  func.func @transform_2(%arg0: i32) -> (i32, i32) {
    %c0_i32 = arith.constant 0 : i32
    %c0_i32_0 = arith.constant 0 : i32
    %c0_i32_1 = arith.constant 0 : i32
    return %c0_i32, %c0_i32_0 : i32, i32
  }
  func.func @transform_3(%arg0: i32) -> (i32, i32) {
    %c0_i32 = arith.constant 0 : i32
    %c0_i32_0 = arith.constant 0 : i32
    %c0_i32_1 = arith.constant 0 : i32
    return %c0_i32, %c0_i32_0 : i32, i32
  }
  func.func @transform_4(%arg0: i32) -> (i32, i32) {
    %c0_i32 = arith.constant 0 : i32
    %c0_i32_0 = arith.constant 0 : i32
    %c0_i32_1 = arith.constant 0 : i32
    return %c0_i32, %c0_i32_0 : i32, i32
  }
  func.func @transform_5(%arg0: i32) -> (i32, i32) {
    %c0_i32 = arith.constant 0 : i32
    %c0_i32_0 = arith.constant 0 : i32
    %c0_i32_1 = arith.constant 0 : i32
    return %c0_i32, %c0_i32_0 : i32, i32
  }
  func.func @transform_6(%arg0: i32) -> (i32, i32) {
    %c0_i32 = arith.constant 0 : i32
    %c0_i32_0 = arith.constant 0 : i32
    %c0_i32_1 = arith.constant 0 : i32
    return %c0_i32, %c0_i32_0 : i32, i32
  }
  func.func @transform_7(%arg0: i32) -> i32 {
    %c0_i32 = arith.constant 0 : i32
    %c0_i32_0 = arith.constant 0 : i32
    return %c0_i32 : i32
  }
  func.func @transform_8(%arg0: i32) -> (i32, i32) {
    %c0_i32 = arith.constant 0 : i32
    %c0_i32_0 = arith.constant 0 : i32
    return %c0_i32, %arg0 : i32, i32
  }
}

</mosaic_0001>

<llo_original>
// kernel: tpu_custom_call.1
$region0: #{tpu_custom_call.1}
  #allocation0 [shape = 'u32[]', space=smem, size = 0x4, offset = 0x4, fixed_abs, tag = 'smem constant byte address 0x4 - core index']
  #allocation1 [shape = 'u32[144,128]{1,0:T(1,128)}', space=vmem, size = 0x12000, scoped, tag = 'internal scratch']
  #allocation2 [shape = 'bf16[8,20]{1,0:T(8,128)(2,1)}', space=vmem, size = 0x800, scoped, tag = 'scratch operand']
  #allocation3 [shape = 'f32[1]{0:T(128)S(6)}', space=smem, size = 0x200, scoped, tag = 'scoped memory for tpu_custom_call.1']
  %s0 = inlined_call_operand.vmem [shape: bf16[8,16], index: 0, kind: input, shape index: {}]
  %s1 = inlined_call_operand.vmem [shape: bf16[8,4], index: 1, kind: input, shape index: {}]
  %s2 = inlined_call_operand.vmem [shape: bf16[20,128], index: 2, kind: input, shape index: {}]
  %s3 = inlined_call_operand.vmem [shape: f32[1,128], index: 3, kind: input, shape index: {}]
  %s4 = inlined_call_operand.hbm [shape: bf16[128,128], index: 4, kind: input, shape index: {}]
  %s5 = inlined_call_operand.vmem [shape: f32[1,128], index: 5, kind: input, shape index: {}]
  %s6 = inlined_call_operand.vmem [shape: bf16[1,128], index: 6, kind: input, shape index: {}]
  %s7 = inlined_call_operand.<no memory space> [shape: f32[1], index: 7, kind: input, shape index: {}]
  %s8 = inlined_call_operand.hbm [shape: f32[1,8], index: 8, kind: output, shape index: {}]
  %s9 = sld [smem:[#allocation0]]
  $region46: #{tpu_custom_call.1} parent=0
    _
  %s11 = ssub.s32 1, %s9
  %s12 = scalar_select 0, %s11, %s9
  %13 = sst [smem:[#allocation3]] %s7
  $region1: #{tpu_custom_call.1} parent=0
    #allocation4 [shape = 'u8[32768]{0}', space=vmem, size = 0x8000, scoped, tag = 'input window, operand 4, single buffered']
    #allocation5 [shape = 's32[1]{0}', space=sflag, size = 0x4, scoped, tag = 'scoped memory for tpu_custom_call.1']
    #allocation6 [shape = 's32[1]{0}', space=sflag, size = 0x4, scoped, tag = 'scoped memory for tpu_custom_call.1']
    #allocation7 [shape = 'u8[512]{0}', space=vmem, size = 0x400, scoped, tag = 'output window, operand 0, single buffered']
    %14 = vsyncpa [#allocation5], 0
    %15 = vsyncpa [#allocation6], 0
    // Predicated region
    $region2: #{tpu_custom_call.1} parent=1 // pred_check
      _
    $region3: #{tpu_custom_call.1} parent=1 // pred_check_branch
      %17 = sbr.rel (0) target = $region5
    $region4: #{tpu_custom_call.1} parent=1 // pred_region
      _
    $region5: #{tpu_custom_call.1} parent=1 // pred_fallthru
      _
    // Predicated region
    $region6: #{tpu_custom_call.1} parent=1 // pred_check
      _
    $region7: #{tpu_custom_call.1} parent=1 // pred_check_branch
      %19 = sbr.rel (0) target = $region9
    $region8: #{tpu_custom_call.1} parent=1 // pred_region
      _
    $region9: #{tpu_custom_call.1} parent=1 // pred_fallthru
      _
    // Predicated region
    $region10: #{tpu_custom_call.1} parent=1 // pred_check
      _
    $region11: #{tpu_custom_call.1} parent=1 // pred_check_branch
      %21 = sbr.rel (0) target = $region13
    $region12: #{tpu_custom_call.1} parent=1 // pred_region
      _
    $region13: #{tpu_custom_call.1} parent=1 // pred_fallthru
      _
    // Predicated region
    $region14: #{tpu_custom_call.1} parent=1 // pred_check
      _
    $region15: #{tpu_custom_call.1} parent=1 // pred_check_branch
      %23 = sbr.rel (0) target = $region17
    $region16: #{tpu_custom_call.1} parent=1 // pred_region
      _
    $region17: #{tpu_custom_call.1} parent=1 // pred_fallthru
      _
    // Predicated region
    $region18: #{tpu_custom_call.1} parent=1 // pred_check
      _
    $region19: #{tpu_custom_call.1} parent=1 // pred_check_branch
      %25 = sbr.rel (0) target = $region21
    $region20: #{tpu_custom_call.1} parent=1 // pred_region
      %s27 = ssub.s32 1024, 1024
      %28 = vsyncadd [#allocation5], %s27
      %s29 = sshll.u32 [#allocation4], 4
      %s30 = int_to_ptr.vmem [resolvable:$true] %s29
      %35 = dma.hbm_to_vmem [thread:$0]  %s4, 1024, %s30, [#allocation5], 64, 64, 4
    $region21: #{tpu_custom_call.1} parent=1 // pred_fallthru
      _
    // Predicated region
    $region22: #{tpu_custom_call.1} parent=1 // pred_check
      _
    $region23: #{tpu_custom_call.1} parent=1 // pred_check_branch
      %37 = sbr.rel (0) target = $region25
    $region24: #{tpu_custom_call.1} parent=1 // pred_region
      _
    $region25: #{tpu_custom_call.1} parent=1 // pred_fallthru
      _
    // Predicated region
    $region26: #{tpu_custom_call.1} parent=1 // pred_check
      _
    $region27: #{tpu_custom_call.1} parent=1 // pred_check_branch
      %39 = sbr.rel (0) target = $region29
    $region28: #{tpu_custom_call.1} parent=1 // pred_region
      _
    $region29: #{tpu_custom_call.1} parent=1 // pred_fallthru
      _
    // Predicated region
    $region30: #{tpu_custom_call.1} parent=1 // pred_check
      _
    $region31: #{tpu_custom_call.1} parent=1 // pred_check_branch
      %41 = sbr.rel (0) target = $region33
    $region32: #{tpu_custom_call.1} parent=1 // pred_region
      _
    $region33: #{tpu_custom_call.1} parent=1 // pred_fallthru
      _
    // Predicated region
    $region34: #{tpu_custom_call.1} parent=1 // pred_check
      _
    $region35: #{tpu_custom_call.1} parent=1 // pred_check_branch
      %43 = sbr.rel (0) target = $region37
    $region36: #{tpu_custom_call.1} parent=1 // pred_region
      %44 = dma.done [#allocation5], 1024
    $region37: #{tpu_custom_call.1} parent=1 // pred_fallthru
      _
    %v46 = vld [vmem:[%s0] sm:$0xf]
    %vm47 = vcmask 125952
    %48 = vst.msk [vmem:[#allocation2] sm:$0xf] %vm47, %v46
    %v49 = vld [vmem:[%s1] sm:$0xf]
    %51 = vrot.lane.b32.xlu0 %v49, 16
    %v52 = vpop.permute.xlu0 %51
    %vm54 = vcmask 158848
    %55 = vst.msk [vmem:[#allocation2] sm:$0xf] %vm54, %v52
    %v56 = vld [vmem:[#allocation2] sm:$0xf]
    %v57 = vld [vmem:[%s2] sm:$0xf]
    %v58 = vld [vmem:[%s2 + $0x4] sm:$0xf]
    %v59 = vld [vmem:[%s2 + $0x8] sm:$0x3]
    %v60 = vld [vmem:[%s3] sm:$0x1]
    %v62 = vlaneseq
    %v63 = vshrl.u32 %v62, 7
    %v64 = vsub.s32 0, %v63
    %v65 = vrot.slane %v60, %v64
    %v70 = vunpack.c.l.b16 %v57
    %v71 = vunpack.c.l.b16 %v58
    %v72 = vunpack.c.l.b16 %v59
    %v73 = vpack.c.b16 %v71, %v70
    %v74 = vpack.c.b16 %v72, %v72
    %vm76 = vcmask 162816
    %v78 = vsel %vm76, %v56, 0
    %vm80 = vcmask 1041408
    %v82 = vsel %vm80, %v74, 0
    %84 = vmatprep.subr.bf16.mxu0 0
    %85 = vmatpush1.bf16.msra.mxu0 %v73
    %86 = vmatprep.subr.bf16.mxu0 0
    %87 = vmatpush1.bf16.msra.mxu0 %v82
    %88 = vmatprep.subr.bf16.mxu0 0
    %89 = vmatpush1.bf16.msra.mxu0 0
    %90 = vmatprep.subr.bf16.mxu0 0
    %91 = vmatpush1.bf16.msra.mxu0 0
    %92 = vmatprep.subr.bf16.mxu0 0
    %93 = vmatpush1.bf16.msra.mxu0 0
    %94 = vmatprep.subr.bf16.mxu0 0
    %95 = vmatpush1.bf16.msra.mxu0 0
    %96 = vmatprep.subr.bf16.mxu0 0
    %97 = vmatpush1.bf16.msra.mxu0 0
    %98 = vmatprep.subr.bf16.mxu0 0
    %99 = vmatpush1.bf16.msra.mxu0 0
    %100 = vmatprep.subr.bf16.mxu0 0
    %101 = vmatpush1.bf16.msra.mxu0 0
    %102 = vmatprep.subr.bf16.mxu0 0
    %103 = vmatpush1.bf16.msra.mxu0 0
    %104 = vmatprep.subr.bf16.mxu0 0
    %105 = vmatpush1.bf16.msra.mxu0 0
    %106 = vmatprep.subr.bf16.mxu0 0
    %107 = vmatpush1.bf16.msra.mxu0 0
    %108 = vmatprep.subr.bf16.mxu0 0
    %109 = vmatpush1.bf16.msra.mxu0 0
    %110 = vmatprep.subr.bf16.mxu0 0
    %111 = vmatpush1.bf16.msra.mxu0 0
    %112 = vmatprep.subr.bf16.mxu0 0
    %113 = vmatpush1.bf16.msra.mxu0 0
    %114 = vmatprep.subr.bf16.mxu0 0
    %115 = vmatpush1.bf16.msra.mxu0 0
    %116 = vmatprep.mubr.bf16.mxu0 0
    %117 = vmatmul.mubr.bf16.gmra.mrb[0].mxu0 %v78
    %v118 = vpop.f32.mrb[0].mxu0
    %v119 = vadd.f32 %v65, %v118
    %v120 = vpop.f32.mrb[0].mxu0
    %v121 = vpop.f32.mrb[0].mxu0
    %v122 = vpop.f32.mrb[0].mxu0
    %123 = vdwg.mxu0
    %v124 = vmax.f32 %v119, 0.0
    %v125 = vpack.c.bf16 %v124, %v124
    %v126 = vld [vmem:[#allocation4] sm:$0xf]
    %v127 = vld [vmem:[#allocation4 + $0x4] sm:$0xf]
    %v128 = vld [vmem:[#allocation4 + $0x8] sm:$0xf]
    %v129 = vld [vmem:[#allocation4 + $0xc] sm:$0xf]
    %v130 = vld [vmem:[#allocation4 + $0x10] sm:$0xf]
    %v131 = vld [vmem:[#allocation4 + $0x14] sm:$0xf]
    %v132 = vld [vmem:[#allocation4 + $0x18] sm:$0xf]
    %v133 = vld [vmem:[#allocation4 + $0x1c] sm:$0xf]
    %v134 = vld [vmem:[#allocation4 + $0x20] sm:$0xf]
    %v135 = vld [vmem:[#allocation4 + $0x24] sm:$0xf]
    %v136 = vld [vmem:[#allocation4 + $0x28] sm:$0xf]
    %v137 = vld [vmem:[#allocation4 + $0x2c] sm:$0xf]
    %v138 = vld [vmem:[#allocation4 + $0x30] sm:$0xf]
    %v139 = vld [vmem:[#allocation4 + $0x34] sm:$0xf]
    %v140 = vld [vmem:[#allocation4 + $0x38] sm:$0xf]
    %v141 = vld [vmem:[#allocation4 + $0x3c] sm:$0xf]
    %v142 = vld [vmem:[%s5] sm:$0x1]
    %v144 = vlaneseq
    %v145 = vshrl.u32 %v144, 7
    %v146 = vsub.s32 0, %v145
    %v147 = vrot.slane %v142, %v146
    %v165 = vunpack.c.l.b16 %v126
    %v166 = vunpack.c.l.b16 %v127
    %v167 = vunpack.c.l.b16 %v128
    %v168 = vunpack.c.l.b16 %v129
    %v169 = vunpack.c.l.b16 %v130
    %v170 = vunpack.c.l.b16 %v131
    %v171 = vunpack.c.l.b16 %v132
    %v172 = vunpack.c.l.b16 %v133
    %v173 = vunpack.c.l.b16 %v134
    %v174 = vunpack.c.l.b16 %v135
    %v175 = vunpack.c.l.b16 %v136
    %v176 = vunpack.c.l.b16 %v137
    %v177 = vunpack.c.l.b16 %v138
    %v178 = vunpack.c.l.b16 %v139
    %v179 = vunpack.c.l.b16 %v140
    %v180 = vunpack.c.l.b16 %v141
    %v181 = vpack.c.b16 %v166, %v165
    %v182 = vpack.c.b16 %v168, %v167
    %v183 = vpack.c.b16 %v170, %v169
    %v184 = vpack.c.b16 %v172, %v171
    %v185 = vpack.c.b16 %v174, %v173
    %v186 = vpack.c.b16 %v176, %v175
    %v187 = vpack.c.b16 %v178, %v177
    %v188 = vpack.c.b16 %v180, %v179
    %197 = vmatprep.subr.bf16.mxu0 0
    %198 = vmatpush1.bf16.msra.mxu0 %v181
    %199 = vmatprep.subr.bf16.mxu0 0
    %200 = vmatpush1.bf16.msra.mxu0 %v182
    %201 = vmatprep.subr.bf16.mxu0 0
    %202 = vmatpush1.bf16.msra.mxu0 %v183
    %203 = vmatprep.subr.bf16.mxu0 0
    %204 = vmatpush1.bf16.msra.mxu0 %v184
    %205 = vmatprep.subr.bf16.mxu0 0
    %206 = vmatpush1.bf16.msra.mxu0 %v185
    %207 = vmatprep.subr.bf16.mxu0 0
    %208 = vmatpush1.bf16.msra.mxu0 %v186
    %209 = vmatprep.subr.bf16.mxu0 0
    %210 = vmatpush1.bf16.msra.mxu0 %v187
    %211 = vmatprep.subr.bf16.mxu0 0
    %212 = vmatpush1.bf16.msra.mxu0 %v188
    %213 = vmatprep.subr.bf16.mxu0 0
    %214 = vmatpush1.bf16.msra.mxu0 0
    %215 = vmatprep.subr.bf16.mxu0 0
    %216 = vmatpush1.bf16.msra.mxu0 0
    %217 = vmatprep.subr.bf16.mxu0 0
    %218 = vmatpush1.bf16.msra.mxu0 0
    %219 = vmatprep.subr.bf16.mxu0 0
    %220 = vmatpush1.bf16.msra.mxu0 0
    %221 = vmatprep.subr.bf16.mxu0 0
    %222 = vmatpush1.bf16.msra.mxu0 0
    %223 = vmatprep.subr.bf16.mxu0 0
    %224 = vmatpush1.bf16.msra.mxu0 0
    %225 = vmatprep.subr.bf16.mxu0 0
    %226 = vmatpush1.bf16.msra.mxu0 0
    %227 = vmatprep.subr.bf16.mxu0 0
    %228 = vmatpush1.bf16.msra.mxu0 0
    %229 = vmatprep.mubr.bf16.mxu0 0
    %230 = vmatmul.mubr.bf16.gmra.mrb[0].mxu0 %v125
    %v231 = vpop.f32.mrb[0].mxu0
    %v232 = vadd.f32 %v147, %v231
    %v233 = vpop.f32.mrb[0].mxu0
    %v234 = vpop.f32.mrb[0].mxu0
    %v235 = vpop.f32.mrb[0].mxu0
    %236 = vdwg.mxu0
    %v237 = vmax.f32 %v232, 0.0
    %v238 = vld [vmem:[%s6] sm:$0x1]
    %v239 = vpack.c.bf16 %v237, %v237
    %s240 = sld [smem:[#allocation3]]
    %v241 = vstv %s240
    %242 = vmatprep.subr.bf16.mxu0 0
    %243 = vmatpush1.bf16.xpose.msra.mxu0 %v239
    %244 = vmatprep.subr.bf16.mxu0 0
    %245 = vmatpush1.bf16.xpose.msra.mxu0 0
    %246 = vmatprep.subr.bf16.mxu0 0
    %247 = vmatpush1.bf16.xpose.msra.mxu0 0
    %248 = vmatprep.subr.bf16.mxu0 0
    %249 = vmatpush1.bf16.xpose.msra.mxu0 0
    %250 = vmatprep.subr.bf16.mxu0 0
    %251 = vmatpush1.bf16.xpose.msra.mxu0 0
    %252 = vmatprep.subr.bf16.mxu0 0
    %253 = vmatpush1.bf16.xpose.msra.mxu0 0
    %254 = vmatprep.subr.bf16.mxu0 0
    %255 = vmatpush1.bf16.xpose.msra.mxu0 0
    %256 = vmatprep.subr.bf16.mxu0 0
    %257 = vmatpush1.bf16.xpose.msra.mxu0 0
    %258 = vmatprep.subr.bf16.mxu0 0
    %259 = vmatpush1.bf16.xpose.msra.mxu0 0
    %260 = vmatprep.subr.bf16.mxu0 0
    %261 = vmatpush1.bf16.xpose.msra.mxu0 0
    %262 = vmatprep.subr.bf16.mxu0 0
    %263 = vmatpush1.bf16.xpose.msra.mxu0 0
    %264 = vmatprep.subr.bf16.mxu0 0
    %265 = vmatpush1.bf16.xpose.msra.mxu0 0
    %266 = vmatprep.subr.bf16.mxu0 0
    %267 = vmatpush1.bf16.xpose.msra.mxu0 0
    %268 = vmatprep.subr.bf16.mxu0 0
    %269 = vmatpush1.bf16.xpose.msra.mxu0 0
    %270 = vmatprep.subr.bf16.mxu0 0
    %271 = vmatpush1.bf16.xpose.msra.mxu0 0
    %272 = vmatprep.subr.bf16.mxu0 0
    %273 = vmatpush1.bf16.xpose.msra.mxu0 0
    %274 = vmatprep.mubr.bf16.mxu0 0
    %275 = vmatmul.mubr.bf16.gmra.mrb[0].mxu0 %v238
    %v276 = vpop.f32.mrb[0].mxu0
    %v277 = vadd.f32 %v241, %v276
    %v278 = vpop.f32.mrb[0].mxu0
    %v279 = vpop.f32.mrb[0].mxu0
    %v280 = vpop.f32.mrb[0].mxu0
    %281 = vdwg.mxu0
    %vm282 = vcmask 57344
    %283 = vst.msk [vmem:[#allocation7] sm:$0x1] %vm282, %v277
    // Predicated region
    $region38: #{tpu_custom_call.1} parent=1 // pred_check
      _
    $region39: #{tpu_custom_call.1} parent=1 // pred_check_branch
      %285 = sbr.rel (0) target = $region41
    $region40: #{tpu_custom_call.1} parent=1 // pred_region
      %s287 = ssub.s32 16, 16
      %288 = vsyncadd [#allocation6], %s287
      %s290 = sshll.u32 [#allocation7], 4
      %s291 = int_to_ptr.vmem [resolvable:$true] %s290
      %293 = dma.vmem_to_hbm [thread:$0]  %s291, 16, %s8, [#allocation6]
    $region41: #{tpu_custom_call.1} parent=1 // pred_fallthru
      _
    // Predicated region
    $region42: #{tpu_custom_call.1} parent=1 // pred_check
      _
    $region43: #{tpu_custom_call.1} parent=1 // pred_check_branch
      %295 = sbr.rel (0) target = $region45
    $region44: #{tpu_custom_call.1} parent=1 // pred_region
      %296 = dma.done [#allocation6], 16
    $region45: #{tpu_custom_call.1} parent=1 // pred_fallthru
      _
    %297 = vsyncpa [#allocation5], 1
    %298 = vsyncpa [#allocation6], 1

// kernel: tpu_custom_call.1
$region0: #{tpu_custom_call.1}
  #allocation0 [shape = 'u32[]', space=smem, size = 0x4, offset = 0x4, fixed_abs, tag = 'smem constant byte address 0x4 - core index']
  #allocation1 [shape = 'u32[144,128]{1,0:T(1,128)}', space=vmem, size = 0x12000, scoped, tag = 'internal scratch']
  #allocation2 [shape = 'bf16[8,20]{1,0:T(8,128)(2,1)}', space=vmem, size = 0x800, scoped, tag = 'scratch operand']
  #allocation3 [shape = 'f32[1]{0:T(128)S(6)}', space=smem, size = 0x200, scoped, tag = 'scoped memory for tpu_custom_call.1']
  %s0 = inlined_call_operand.vmem [shape: bf16[8,16], index: 0, kind: input, shape index: {}]
  %s1 = inlined_call_operand.vmem [shape: bf16[8,4], index: 1, kind: input, shape index: {}]
  %s2 = inlined_call_operand.vmem [shape: bf16[20,128], index: 2, kind: input, shape index: {}]
  %s3 = inlined_call_operand.vmem [shape: f32[1,128], index: 3, kind: input, shape index: {}]
  %s4 = inlined_call_operand.hbm [shape: bf16[128,128], index: 4, kind: input, shape index: {}]
  %s5 = inlined_call_operand.vmem [shape: f32[1,128], index: 5, kind: input, shape index: {}]
  %s6 = inlined_call_operand.vmem [shape: bf16[1,128], index: 6, kind: input, shape index: {}]
  %s7 = inlined_call_operand.<no memory space> [shape: f32[1], index: 7, kind: input, shape index: {}]
  %s8 = inlined_call_operand.hbm [shape: f32[1,8], index: 8, kind: output, shape index: {}]
  %s9 = sld [smem:[#allocation0]]
  $region46: #{tpu_custom_call.1} parent=0
    _
  %s11 = ssub.s32 1, %s9
  %s12 = scalar_select 0, %s11, %s9
  %13 = sst [smem:[#allocation3]] %s7
  $region1: #{tpu_custom_call.1} parent=0
    #allocation4 [shape = 'u8[32768]{0}', space=vmem, size = 0x8000, scoped, tag = 'input window, operand 4, single buffered']
    #allocation5 [shape = 's32[1]{0}', space=sflag, size = 0x4, scoped, tag = 'scoped memory for tpu_custom_call.1']
    #allocation6 [shape = 's32[1]{0}', space=sflag, size = 0x4, scoped, tag = 'scoped memory for tpu_custom_call.1']
    #allocation7 [shape = 'u8[512]{0}', space=vmem, size = 0x400, scoped, tag = 'output window, operand 0, single buffered']
    %14 = vsyncpa [#allocation5], 0
    %15 = vsyncpa [#allocation6], 0
    // Predicated region
    $region2: #{tpu_custom_call.1} parent=1 // pred_check
      _
    $region3: #{tpu_custom_call.1} parent=1 // pred_check_branch
      %17 = sbr.rel (0) target = $region5
    $region4: #{tpu_custom_call.1} parent=1 // pred_region
      _
    $region5: #{tpu_custom_call.1} parent=1 // pred_fallthru
      _
    // Predicated region
    $region6: #{tpu_custom_call.1} parent=1 // pred_check
      _
    $region7: #{tpu_custom_call.1} parent=1 // pred_check_branch
      %19 = sbr.rel (0) target = $region9
    $region8: #{tpu_custom_call.1} parent=1 // pred_region
      _
    $region9: #{tpu_custom_call.1} parent=1 // pred_fallthru
      _
    // Predicated region
    $region10: #{tpu_custom_call.1} parent=1 // pred_check
      _
    $region11: #{tpu_custom_call.1} parent=1 // pred_check_branch
      %21 = sbr.rel (0) target = $region13
    $region12: #{tpu_custom_call.1} parent=1 // pred_region
      _
    $region13: #{tpu_custom_call.1} parent=1 // pred_fallthru
      _
    // Predicated region
    $region14: #{tpu_custom_call.1} parent=1 // pred_check
      _
    $region15: #{tpu_custom_call.1} parent=1 // pred_check_branch
      %23 = sbr.rel (0) target = $region17
    $region16: #{tpu_custom_call.1} parent=1 // pred_region
      _
    $region17: #{tpu_custom_call.1} parent=1 // pred_fallthru
      _
    // Predicated region
    $region18: #{tpu_custom_call.1} parent=1 // pred_check
      _
    $region19: #{tpu_custom_call.1} parent=1 // pred_check_branch
      %25 = sbr.rel (0) target = $region21
    $region20: #{tpu_custom_call.1} parent=1 // pred_region
      %s27 = ssub.s32 1024, 1024
      %28 = vsyncadd [#allocation5], %s27
      %s29 = sshll.u32 [#allocation4], 4
      %s30 = int_to_ptr.vmem [resolvable:$true] %s29
      %35 = dma.hbm_to_vmem [thread:$0]  %s4, 1024, %s30, [#allocation5], 64, 64, 4
    $region21: #{tpu_custom_call.1} parent=1 // pred_fallthru
      _
    // Predicated region
    $region22: #{tpu_custom_call.1} parent=1 // pred_check
      _
    $region23: #{tpu_custom_call.1} parent=1 // pred_check_branch
      %37 = sbr.rel (0) target = $region25
    $region24: #{tpu_custom_call.1} parent=1 // pred_region
      _
    $region25: #{tpu_custom_call.1} parent=1 // pred_fallthru
      _
    // Predicated region
    $region26: #{tpu_custom_call.1} parent=1 // pred_check
      _
    $region27: #{tpu_custom_call.1} parent=1 // pred_check_branch
      %39 = sbr.rel (0) target = $region29
    $region28: #{tpu_custom_call.1} parent=1 // pred_region
      _
    $region29: #{tpu_custom_call.1} parent=1 // pred_fallthru
      _
    // Predicated region
    $region30: #{tpu_custom_call.1} parent=1 // pred_check
      _
    $region31: #{tpu_custom_call.1} parent=1 // pred_check_branch
      %41 = sbr.rel (0) target = $region33
    $region32: #{tpu_custom_call.1} parent=1 // pred_region
      _
    $region33: #{tpu_custom_call.1} parent=1 // pred_fallthru
      _
    // Predicated region
    $region34: #{tpu_custom_call.1} parent=1 // pred_check
      _
    $region35: #{tpu_custom_call.1} parent=1 // pred_check_branch
      %43 = sbr.rel (0) target = $region37
    $region36: #{tpu_custom_call.1} parent=1 // pred_region
      %44 = dma.done [#allocation5], 1024
    $region37: #{tpu_custom_call.1} parent=1 // pred_fallthru
      _
    %v46 = vld [vmem:[%s0] sm:$0xf]
    %vm47 = vcmask 125952
    %48 = vst.msk [vmem:[#allocation2] sm:$0xf] %vm47, %v46
    %v49 = vld [vmem:[%s1] sm:$0xf]
    %51 = vrot.lane.b32.xlu0 %v49, 16
    %v52 = vpop.permute.xlu0 %51
    %vm54 = vcmask 158848
    %55 = vst.msk [vmem:[#allocation2] sm:$0xf] %vm54, %v52
    %v56 = vld [vmem:[#allocation2] sm:$0xf]
    %v57 = vld [vmem:[%s2] sm:$0xf]
    %v58 = vld [vmem:[%s2 + $0x4] sm:$0xf]
    %v59 = vld [vmem:[%s2 + $0x8] sm:$0x3]
    %v60 = vld [vmem:[%s3] sm:$0x1]
    %v62 = vlaneseq
    %v63 = vshrl.u32 %v62, 7
    %v64 = vsub.s32 0, %v63
    %v65 = vrot.slane %v60, %v64
    %v70 = vunpack.c.l.b16 %v57
    %v71 = vunpack.c.l.b16 %v58
    %v72 = vunpack.c.l.b16 %v59
    %v73 = vpack.c.b16 %v71, %v70
    %v74 = vpack.c.b16 %v72, %v72
    %vm76 = vcmask 162816
    %v78 = vsel %vm76, %v56, 0
    %vm80 = vcmask 1041408
    %v82 = vsel %vm80, %v74, 0
    %84 = vmatprep.subr.bf16.mxu0 0
    %85 = vmatpush1.bf16.msra.mxu0 %v73
    %86 = vmatprep.subr.bf16.mxu0 0
    %87 = vmatpush1.bf16.msra.mxu0 %v82
    %88 = vmatprep.subr.bf16.mxu0 0
    %89 = vmatpush1.bf16.msra.mxu0 0
    %90 = vmatprep.subr.bf16.mxu0 0
    %91 = vmatpush1.bf16.msra.mxu0 0
    %92 = vmatprep.subr.bf16.mxu0 0
    %93 = vmatpush1.bf16.msra.mxu0 0
    %94 = vmatprep.subr.bf16.mxu0 0
    %95 = vmatpush1.bf16.msra.mxu0 0
    %96 = vmatprep.subr.bf16.mxu0 0
    %97 = vmatpush1.bf16.msra.mxu0 0
    %98 = vmatprep.subr.bf16.mxu0 0
    %99 = vmatpush1.bf16.msra.mxu0 0
    %100 = vmatprep.subr.bf16.mxu0 0
    %101 = vmatpush1.bf16.msra.mxu0 0
    %102 = vmatprep.subr.bf16.mxu0 0
    %103 = vmatpush1.bf16.msra.mxu0 0
    %104 = vmatprep.subr.bf16.mxu0 0
    %105 = vmatpush1.bf16.msra.mxu0 0
    %106 = vmatprep.subr.bf16.mxu0 0
    %107 = vmatpush1.bf16.msra.mxu0 0
    %108 = vmatprep.subr.bf16.mxu0 0
    %109 = vmatpush1.bf16.msra.mxu0 0
    %110 = vmatprep.subr.bf16.mxu0 0
    %111 = vmatpush1.bf16.msra.mxu0 0
    %112 = vmatprep.subr.bf16.mxu0 0
    %113 = vmatpush1.bf16.msra.mxu0 0
    %114 = vmatprep.subr.bf16.mxu0 0
    %115 = vmatpush1.bf16.msra.mxu0 0
    %116 = vmatprep.mubr.bf16.mxu0 0
    %117 = vmatmul.mubr.bf16.gmra.mrb[0].mxu0 %v78
    %v118 = vpop.f32.mrb[0].mxu0
    %v119 = vadd.f32 %v65, %v118
    %v120 = vpop.f32.mrb[0].mxu0
    %v121 = vpop.f32.mrb[0].mxu0
    %v122 = vpop.f32.mrb[0].mxu0
    %123 = vdwg.mxu0
    %v124 = vmax.f32 %v119, 0.0
    %v125 = vpack.c.bf16 %v124, %v124
    %v126 = vld [vmem:[#allocation4] sm:$0xf]
    %v127 = vld [vmem:[#allocation4 + $0x4] sm:$0xf]
    %v128 = vld [vmem:[#allocation4 + $0x8] sm:$0xf]
    %v129 = vld [vmem:[#allocation4 + $0xc] sm:$0xf]
    %v130 = vld [vmem:[#allocation4 + $0x10] sm:$0xf]
    %v131 = vld [vmem:[#allocation4 + $0x14] sm:$0xf]
    %v132 = vld [vmem:[#allocation4 + $0x18] sm:$0xf]
    %v133 = vld [vmem:[#allocation4 + $0x1c] sm:$0xf]
    %v134 = vld [vmem:[#allocation4 + $0x20] sm:$0xf]
    %v135 = vld [vmem:[#allocation4 + $0x24] sm:$0xf]
    %v136 = vld [vmem:[#allocation4 + $0x28] sm:$0xf]
    %v137 = vld [vmem:[#allocation4 + $0x2c] sm:$0xf]
    %v138 = vld [vmem:[#allocation4 + $0x30] sm:$0xf]
    %v139 = vld [vmem:[#allocation4 + $0x34] sm:$0xf]
    %v140 = vld [vmem:[#allocation4 + $0x38] sm:$0xf]
    %v141 = vld [vmem:[#allocation4 + $0x3c] sm:$0xf]
    %v142 = vld [vmem:[%s5] sm:$0x1]
    %v144 = vlaneseq
    %v145 = vshrl.u32 %v144, 7
    %v146 = vsub.s32 0, %v145
    %v147 = vrot.slane %v142, %v146
    %v165 = vunpack.c.l.b16 %v126
    %v166 = vunpack.c.l.b16 %v127
    %v167 = vunpack.c.l.b16 %v128
    %v168 = vunpack.c.l.b16 %v129
    %v169 = vunpack.c.l.b16 %v130
    %v170 = vunpack.c.l.b16 %v131
    %v171 = vunpack.c.l.b16 %v132
    %v172 = vunpack.c.l.b16 %v133
    %v173 = vunpack.c.l.b16 %v134
    %v174 = vunpack.c.l.b16 %v135
    %v175 = vunpack.c.l.b16 %v136
    %v176 = vunpack.c.l.b16 %v137
    %v177 = vunpack.c.l.b16 %v138
    %v178 = vunpack.c.l.b16 %v139
    %v179 = vunpack.c.l.b16 %v140
    %v180 = vunpack.c.l.b16 %v141
    %v181 = vpack.c.b16 %v166, %v165
    %v182 = vpack.c.b16 %v168, %v167
    %v183 = vpack.c.b16 %v170, %v169
    %v184 = vpack.c.b16 %v172, %v171
    %v185 = vpack.c.b16 %v174, %v173
    %v186 = vpack.c.b16 %v176, %v175
    %v187 = vpack.c.b16 %v178, %v177
    %v188 = vpack.c.b16 %v180, %v179
    %197 = vmatprep.subr.bf16.mxu0 0
    %198 = vmatpush1.bf16.msra.mxu0 %v181
    %199 = vmatprep.subr.bf16.mxu0 0
    %200 = vmatpush1.bf16.msra.mxu0 %v182
    %201 = vmatprep.subr.bf16.mxu0 0
    %202 = vmatpush1.bf16.msra.mxu0 %v183
    %203 = vmatprep.subr.bf16.mxu0 0
    %204 = vmatpush1.bf16.msra.mxu0 %v184
    %205 = vmatprep.subr.bf16.mxu0 0
    %206 = vmatpush1.bf16.msra.mxu0 %v185
    %207 = vmatprep.subr.bf16.mxu0 0
    %208 = vmatpush1.bf16.msra.mxu0 %v186
    %209 = vmatprep.subr.bf16.mxu0 0
    %210 = vmatpush1.bf16.msra.mxu0 %v187
    %211 = vmatprep.subr.bf16.mxu0 0
    %212 = vmatpush1.bf16.msra.mxu0 %v188
    %213 = vmatprep.subr.bf16.mxu0 0
    %214 = vmatpush1.bf16.msra.mxu0 0
    %215 = vmatprep.subr.bf16.mxu0 0
    %216 = vmatpush1.bf16.msra.mxu0 0
    %217 = vmatprep.subr.bf16.mxu0 0
    %218 = vmatpush1.bf16.msra.mxu0 0
    %219 = vmatprep.subr.bf16.mxu0 0
    %220 = vmatpush1.bf16.msra.mxu0 0
    %221 = vmatprep.subr.bf16.mxu0 0
    %222 = vmatpush1.bf16.msra.mxu0 0
    %223 = vmatprep.subr.bf16.mxu0 0
    %224 = vmatpush1.bf16.msra.mxu0 0
    %225 = vmatprep.subr.bf16.mxu0 0
    %226 = vmatpush1.bf16.msra.mxu0 0
    %227 = vmatprep.subr.bf16.mxu0 0
    %228 = vmatpush1.bf16.msra.mxu0 0
    %229 = vmatprep.mubr.bf16.mxu0 0
    %230 = vmatmul.mubr.bf16.gmra.mrb[0].mxu0 %v125
    %v231 = vpop.f32.mrb[0].mxu0
    %v232 = vadd.f32 %v147, %v231
    %v233 = vpop.f32.mrb[0].mxu0
    %v234 = vpop.f32.mrb[0].mxu0
    %v235 = vpop.f32.mrb[0].mxu0
    %236 = vdwg.mxu0
    %v237 = vmax.f32 %v232, 0.0
    %v238 = vld [vmem:[%s6] sm:$0x1]
    %v239 = vpack.c.bf16 %v237, %v237
    %s240 = sld [smem:[#allocation3]]
    %v241 = vstv %s240
    %242 = vmatprep.subr.bf16.mxu0 0
    %243 = vmatpush1.bf16.xpose.msra.mxu0 %v239
    %244 = vmatprep.subr.bf16.mxu0 0
    %245 = vmatpush1.bf16.xpose.msra.mxu0 0
    %246 = vmatprep.subr.bf16.mxu0 0
    %247 = vmatpush1.bf16.xpose.msra.mxu0 0
    %248 = vmatprep.subr.bf16.mxu0 0
    %249 = vmatpush1.bf16.xpose.msra.mxu0 0
    %250 = vmatprep.subr.bf16.mxu0 0
    %251 = vmatpush1.bf16.xpose.msra.mxu0 0
    %252 = vmatprep.subr.bf16.mxu0 0
    %253 = vmatpush1.bf16.xpose.msra.mxu0 0
    %254 = vmatprep.subr.bf16.mxu0 0
    %255 = vmatpush1.bf16.xpose.msra.mxu0 0
    %256 = vmatprep.subr.bf16.mxu0 0
    %257 = vmatpush1.bf16.xpose.msra.mxu0 0
    %258 = vmatprep.subr.bf16.mxu0 0
    %259 = vmatpush1.bf16.xpose.msra.mxu0 0
    %260 = vmatprep.subr.bf16.mxu0 0
    %261 = vmatpush1.bf16.xpose.msra.mxu0 0
    %262 = vmatprep.subr.bf16.mxu0 0
    %263 = vmatpush1.bf16.xpose.msra.mxu0 0
    %264 = vmatprep.subr.bf16.mxu0 0
    %265 = vmatpush1.bf16.xpose.msra.mxu0 0
    %266 = vmatprep.subr.bf16.mxu0 0
    %267 = vmatpush1.bf16.xpose.msra.mxu0 0
    %268 = vmatprep.subr.bf16.mxu0 0
    %269 = vmatpush1.bf16.xpose.msra.mxu0 0
    %270 = vmatprep.subr.bf16.mxu0 0
    %271 = vmatpush1.bf16.xpose.msra.mxu0 0
    %272 = vmatprep.subr.bf16.mxu0 0
    %273 = vmatpush1.bf16.xpose.msra.mxu0 0
    %274 = vmatprep.mubr.bf16.mxu0 0
    %275 = vmatmul.mubr.bf16.gmra.mrb[0].mxu0 %v238
    %v276 = vpop.f32.mrb[0].mxu0
    %v277 = vadd.f32 %v241, %v276
    %v278 = vpop.f32.mrb[0].mxu0
    %v279 = vpop.f32.mrb[0].mxu0
    %v280 = vpop.f32.mrb[0].mxu0
    %281 = vdwg.mxu0
    %vm282 = vcmask 57344
    %283 = vst.msk [vmem:[#allocation7] sm:$0x1] %vm282, %v277
    // Predicated region
    $region38: #{tpu_custom_call.1} parent=1 // pred_check
      _
    $region39: #{tpu_custom_call.1} parent=1 // pred_check_branch
      %285 = sbr.rel (0) target = $region41
    $region40: #{tpu_custom_call.1} parent=1 // pred_region
      %s287 = ssub.s32 16, 16
      %288 = vsyncadd [#allocation6], %s287
      %s290 = sshll.u32 [#allocation7], 4
      %s291 = int_to_ptr.vmem [resolvable:$true] %s290
      %293 = dma.vmem_to_hbm [thread:$0]  %s291, 16, %s8, [#allocation6]
    $region41: #{tpu_custom_call.1} parent=1 // pred_fallthru
      _
    // Predicated region
    $region42: #{tpu_custom_call.1} parent=1 // pred_check
      _
    $region43: #{tpu_custom_call.1} parent=1 // pred_check_branch
      %295 = sbr.rel (0) target = $region45
    $region44: #{tpu_custom_call.1} parent=1 // pred_region
      %296 = dma.done [#allocation6], 16
    $region45: #{tpu_custom_call.1} parent=1 // pred_fallthru
      _
    %297 = vsyncpa [#allocation5], 1
    %298 = vsyncpa [#allocation6], 1

</llo_original>
